<compile_context>
chip_gen: v6e
topology: v6e:2x2x1
jax: 0.10.0
libtpu: 0.0.40
codegen_flags: <defaults>
</compile_context>

<pallas_src>
import functools

import jax
import jax.numpy as jnp
from jax import lax
from jax.experimental import pallas as pl
from jax.experimental.pallas import tpu as pltpu

_EPS = 1e-8

_TARGET_BLOCK_BYTES = 4 * 1024 * 1024   # per-input, per-grid-step DMA target
_ROW_BYTES_CAP = 16 * 1024              # feature-tile bytes per row (keeps TB healthy)
_MAX_BLOCK_ROWS = 8192                  # sanity cap on the batch tile


def _vmem_limit_bytes():
    """Generation-aware scoped-VMEM request (v5e/v6e: 128 MiB phys, v7x: 64 MiB)."""
    try:
        cap = int(pltpu.get_tpu_info().vmem_capacity_bytes)
    except Exception:
        cap = 64 * 1024 * 1024          # conservative fallback: v7x physical VMEM
    return min(cap * 3 // 4, 100 * 1024 * 1024)


def _choose_tiles(batch, feat, itemsize, vmem_limit):
    """Pick (TB, TD) batch/feature tiles sized by bytes, not by a fixed row cap."""
    # Sublane granularity: 8 for 4-byte, 16 for 2-byte, 32 for 1-byte dtypes.
    granule = 8 if itemsize >= 4 else (16 if itemsize == 2 else 32)

    # Feature tile: full D when a row fits the per-row byte cap, otherwise a
    # multiple-of-128 slice plus a trailing "arbitrary" reduction grid axis.
    if feat * itemsize <= _ROW_BYTES_CAP:
        td = feat
    else:
        td = max(128, (_ROW_BYTES_CAP // itemsize) // 128 * 128)

    # Batch tile: target multi-MiB per-step input blocks, respecting a VMEM
    # accounting of 2 inputs x 2 pipeline buffers, possible f32 upcast
    # temporaries (bf16/int8 inputs), and lane-padded (TB,1) scratch/out bufs.
    upcast_bytes = 2 * td * 4 if itemsize < 4 else 0
    per_row = 2 * 2 * td * itemsize + upcast_bytes + (3 + 2) * 128 * 4
    tb_vmem = max(granule, int(vmem_limit * 0.9) // per_row // granule * granule)
    tb_target = max(granule, _TARGET_BLOCK_BYTES // (td * itemsize) // granule * granule)
    tb = min(tb_target, tb_vmem, _MAX_BLOCK_ROWS)

    # Never let the batch grid collapse to one step when it can be split: >=2
    # steps lets dimension_semantics=("parallel", ...) shard the rows across
    # v7x's two TensorCores (neutral on single-TC v5e/v6e).
    if tb >= batch:
        if batch > granule:
            half = -(-batch // 2)                      # cdiv(batch, 2)
            tb = -(-half // granule) * granule         # round up to granule
            if tb >= batch:
                tb = batch
        else:
            tb = batch
    return tb, td


def _cosine_rows_kernel(s_ref, t_ref, cos_ref, dot_acc, ss_acc, tt_acc,
                        *, feat, feat_tile):
    j = pl.program_id(1)            # reduction step along the feature axis

    @pl.when(j == 0)
    def _init():
        dot_acc[...] = jnp.zeros_like(dot_acc)
        ss_acc[...] = jnp.zeros_like(ss_acc)
        tt_acc[...] = jnp.zeros_like(tt_acc)

    # Accumulate in f32 regardless of input dtype (no-op for f32 inputs).
    s = s_ref[...].astype(jnp.float32)
    t = t_ref[...].astype(jnp.float32)

    if feat % feat_tile != 0:
        # Ragged last feature block: mask out-of-range (garbage) columns.
        col = lax.broadcasted_iota(jnp.int32, s.shape, 1) + j * feat_tile
        valid = col < feat
        s = jnp.where(valid, s, 0.0)
        t = jnp.where(valid, t, 0.0)

    dot_acc[...] += jnp.sum(s * t, axis=1, keepdims=True)
    ss_acc[...] += jnp.sum(s * s, axis=1, keepdims=True)
    tt_acc[...] += jnp.sum(t * t, axis=1, keepdims=True)

    @pl.when(j == pl.num_programs(1) - 1)
    def _finalize():
        # sqrt(max(ns*nt, eps^2)) == max(||s||*||t||, eps); rsqrt+mul keeps the
        # transcendental on the EUP slot instead of a vector divide.
        inv = lax.rsqrt(jnp.maximum(ss_acc[...] * tt_acc[...], _EPS * _EPS))
        cos_ref[...] = dot_acc[...] * inv


@functools.partial(jax.jit, static_argnames=("block_rows", "block_cols"))
def cosine_similarity_loss(student_outputs, teacher_outputs, *,
                           block_rows=None, block_cols=None):
    """loss = 1 - mean_b cos(student[b], teacher[b]) for 2-D (B, D) inputs.

    The kernel is purely HBM-bandwidth bound; feeding bf16 inputs (accumulation
    happens in f32 inside the kernel) roughly halves runtime vs f32 inputs.
    """
    assert student_outputs.shape == teacher_outputs.shape
    assert student_outputs.ndim == 2, "kernel expects (B, D) inputs"
    B, D = student_outputs.shape
    itemsize = jnp.dtype(student_outputs.dtype).itemsize

    vmem_limit = _vmem_limit_bytes()
    tb, td = _choose_tiles(B, D, itemsize, vmem_limit)
    if block_rows is not None:                      # manual override (testing/tuning)
        tb = B if block_rows >= B else int(block_rows)
        assert tb == B or tb % 8 == 0, "block_rows must be a multiple of 8"
    if block_cols is not None:
        td = D if block_cols >= D else int(block_cols)
        assert td == D or td % 128 == 0, "block_cols must be a multiple of 128"

    grid = (pl.cdiv(B, tb), pl.cdiv(D, td))
    kernel = functools.partial(_cosine_rows_kernel, feat=D, feat_tile=td)

    cos = pl.pallas_call(
        kernel,
        out_shape=jax.ShapeDtypeStruct((B, 1), jnp.float32),
        grid_spec=pltpu.PrefetchScalarGridSpec(
            num_scalar_prefetch=0,
            grid=grid,
            in_specs=[
                pl.BlockSpec((tb, td), lambda i, j: (i, j)),
                pl.BlockSpec((tb, td), lambda i, j: (i, j)),
            ],
            out_specs=pl.BlockSpec((tb, 1), lambda i, j: (i, 0)),
            scratch_shapes=[
                pltpu.VMEM((tb, 1), jnp.float32),   # dot accumulator
                pltpu.VMEM((tb, 1), jnp.float32),   # ||s||^2 accumulator
                pltpu.VMEM((tb, 1), jnp.float32),   # ||t||^2 accumulator
            ],
        ),
        compiler_params=pltpu.CompilerParams(
            dimension_semantics=("parallel", "arbitrary"),
            vmem_limit_bytes=vmem_limit,
        ),
    )(student_outputs, teacher_outputs)

    # Tiny finalize in plain XLA (free): loss = 1 - mean_b(cos_b).
    return 1.0 - jnp.mean(cos)


def _reference_loss(s, t):
    s32 = s.astype(jnp.float32)
    t32 = t.astype(jnp.float32)
    dot = jnp.sum(s32 * t32, axis=1)
    denom = jnp.sqrt(
        jnp.maximum(jnp.sum(s32 * s32, axis=1) * jnp.sum(t32 * t32, axis=1),
                    _EPS * _EPS))
    return 1.0 - jnp.mean(dot / denom)


if __name__ == "__main__":
    key = jax.random.PRNGKey(0)
    k1, k2, k3, k4, k5, k6 = jax.random.split(key, 6)

    # Shapes consistent with LSTM distillation outputs: (batch, hidden).
    student = jax.random.normal(k1, (8, 128), dtype=jnp.float32)
    teacher = jax.random.normal(k2, (8, 128), dtype=jnp.float32)
    loss = cosine_similarity_loss(student, teacher)
    jax.block_until_ready(loss)
    assert jnp.allclose(loss, _reference_loss(student, teacher), atol=1e-5), loss

    # Multi-block batch + tiled/ragged feature axis: exercises the D-reduction
    # grid axis, the scratch accumulators, and the ragged-column mask.
    s2 = jax.random.normal(k3, (50, 200), dtype=jnp.float32)
    t2 = jax.random.normal(k4, (50, 200), dtype=jnp.float32)
    loss2 = cosine_similarity_loss(s2, t2, block_rows=16, block_cols=128)
    jax.block_until_ready(loss2)
    assert jnp.allclose(loss2, _reference_loss(s2, t2), atol=1e-5), loss2

    # bf16 inputs (halved HBM traffic), f32 accumulation inside the kernel;
    # auto-tiling splits B=24 into two batch blocks (v7x megacore path).
    s3 = jax.random.normal(k5, (24, 256), dtype=jnp.bfloat16)
    t3 = jax.random.normal(k6, (24, 256), dtype=jnp.bfloat16)
    loss3 = cosine_similarity_loss(s3, t3)
    jax.block_until_ready(loss3)
    assert jnp.allclose(loss3, _reference_loss(s3, t3), atol=1e-2), loss3

    print("KERNEL_OK")
</pallas_src>

<mosaic_0001>
module attributes {stable_mosaic.version = 11 : i64} {
  func.func @_cosine_rows_kernel(%arg0: i32, %arg1: i32, %arg2: memref<8x128xf32, #tpu.memory_space<vmem>>, %arg3: memref<8x128xf32, #tpu.memory_space<vmem>>, %arg4: memref<8x1xf32, #tpu.memory_space<vmem>>, %arg5: memref<8x1xf32, #tpu.memory_space<vmem>>, %arg6: memref<8x1xf32, #tpu.memory_space<vmem>>, %arg7: memref<8x1xf32, #tpu.memory_space<vmem>>) attributes {dimension_semantics = [#tpu.dimension_semantics<parallel>, #tpu.dimension_semantics<arbitrary>], iteration_bounds = array<i64: 1, 1>, scalar_prefetch = 0 : i64, scratch_operands = 3 : i64, tpu.core_type = #tpu.core_type<tc>, window_params = [{transform_indices = @transform_0, window_bounds = array<i64: 8, 128>}, {transform_indices = @transform_1, window_bounds = array<i64: 8, 128>}, {transform_indices = @transform_2, window_bounds = array<i64: 8, 1>}]} {
    %c0_i32 = arith.constant 0 : i32
    %0 = arith.cmpi eq, %arg1, %c0_i32 : i32
    %1 = arith.extui %0 : i1 to i32
    %c0_i32_0 = arith.constant 0 : i32
    %2 = arith.cmpi ne, %1, %c0_i32_0 : i32
    scf.if %2 {
      %cst_20 = arith.constant 0.000000e+00 : f32
      %26 = vector.broadcast %cst_20 : f32 to vector<8x1xf32>
      %c0_21 = arith.constant 0 : index
      %c0_22 = arith.constant 0 : index
      %27 = vector.load %arg5[%c0_21, %c0_22] : memref<8x1xf32, #tpu.memory_space<vmem>>, vector<8x1xf32>
      tpu.vector_store %arg5[%c0_21, %c0_22], %26 {strides = array<i32>} : memref<8x1xf32, #tpu.memory_space<vmem>>, vector<8x1xf32>,
      %cst_23 = arith.constant 0.000000e+00 : f32
      %28 = vector.broadcast %cst_23 : f32 to vector<8x1xf32>
      %c0_24 = arith.constant 0 : index
      %c0_25 = arith.constant 0 : index
      %29 = vector.load %arg6[%c0_24, %c0_25] : memref<8x1xf32, #tpu.memory_space<vmem>>, vector<8x1xf32>
      tpu.vector_store %arg6[%c0_24, %c0_25], %28 {strides = array<i32>} : memref<8x1xf32, #tpu.memory_space<vmem>>, vector<8x1xf32>,
      %cst_26 = arith.constant 0.000000e+00 : f32
      %30 = vector.broadcast %cst_26 : f32 to vector<8x1xf32>
      %c0_27 = arith.constant 0 : index
      %c0_28 = arith.constant 0 : index
      %31 = vector.load %arg7[%c0_27, %c0_28] : memref<8x1xf32, #tpu.memory_space<vmem>>, vector<8x1xf32>
      tpu.vector_store %arg7[%c0_27, %c0_28], %30 {strides = array<i32>} : memref<8x1xf32, #tpu.memory_space<vmem>>, vector<8x1xf32>,
    } else {
    }
    %c0 = arith.constant 0 : index
    %c0_1 = arith.constant 0 : index
    %3 = vector.load %arg2[%c0, %c0_1] : memref<8x128xf32, #tpu.memory_space<vmem>>, vector<8x128xf32>
    %c0_2 = arith.constant 0 : index
    %c0_3 = arith.constant 0 : index
    %4 = vector.load %arg3[%c0_2, %c0_3] : memref<8x128xf32, #tpu.memory_space<vmem>>, vector<8x128xf32>
    %c0_4 = arith.constant 0 : index
    %c0_5 = arith.constant 0 : index
    %5 = vector.load %arg5[%c0_4, %c0_5] : memref<8x1xf32, #tpu.memory_space<vmem>>, vector<8x1xf32>
    %6 = arith.mulf %3, %4 : vector<8x128xf32>
    %cst = arith.constant dense<0.000000e+00> : vector<8xf32>
    %7 = vector.multi_reduction <add>, %6, %cst [1] : vector<8x128xf32> to vector<8xf32>
    %8 = vector.shape_cast %7 : vector<8xf32> to vector<8x1xf32>
    %9 = arith.addf %5, %8 : vector<8x1xf32>
    %c0_6 = arith.constant 0 : index
    %c0_7 = arith.constant 0 : index
    %10 = vector.load %arg5[%c0_6, %c0_7] : memref<8x1xf32, #tpu.memory_space<vmem>>, vector<8x1xf32>
    tpu.vector_store %arg5[%c0_6, %c0_7], %9 {strides = array<i32>} : memref<8x1xf32, #tpu.memory_space<vmem>>, vector<8x1xf32>,
    %c0_8 = arith.constant 0 : index
    %c0_9 = arith.constant 0 : index
    %11 = vector.load %arg6[%c0_8, %c0_9] : memref<8x1xf32, #tpu.memory_space<vmem>>, vector<8x1xf32>
    %12 = arith.mulf %3, %3 : vector<8x128xf32>
    %cst_10 = arith.constant dense<0.000000e+00> : vector<8xf32>
    %13 = vector.multi_reduction <add>, %12, %cst_10 [1] : vector<8x128xf32> to vector<8xf32>
    %14 = vector.shape_cast %13 : vector<8xf32> to vector<8x1xf32>
    %15 = arith.addf %11, %14 : vector<8x1xf32>
    %c0_11 = arith.constant 0 : index
    %c0_12 = arith.constant 0 : index
    %16 = vector.load %arg6[%c0_11, %c0_12] : memref<8x1xf32, #tpu.memory_space<vmem>>, vector<8x1xf32>
    tpu.vector_store %arg6[%c0_11, %c0_12], %15 {strides = array<i32>} : memref<8x1xf32, #tpu.memory_space<vmem>>, vector<8x1xf32>,
    %c0_13 = arith.constant 0 : index
    %c0_14 = arith.constant 0 : index
    %17 = vector.load %arg7[%c0_13, %c0_14] : memref<8x1xf32, #tpu.memory_space<vmem>>, vector<8x1xf32>
    %18 = arith.mulf %4, %4 : vector<8x128xf32>
    %cst_15 = arith.constant dense<0.000000e+00> : vector<8xf32>
    %19 = vector.multi_reduction <add>, %18, %cst_15 [1] : vector<8x128xf32> to vector<8xf32>
    %20 = vector.shape_cast %19 : vector<8xf32> to vector<8x1xf32>
    %21 = arith.addf %17, %20 : vector<8x1xf32>
    %c0_16 = arith.constant 0 : index
    %c0_17 = arith.constant 0 : index
    %22 = vector.load %arg7[%c0_16, %c0_17] : memref<8x1xf32, #tpu.memory_space<vmem>>, vector<8x1xf32>
    tpu.vector_store %arg7[%c0_16, %c0_17], %21 {strides = array<i32>} : memref<8x1xf32, #tpu.memory_space<vmem>>, vector<8x1xf32>,
    %c0_i32_18 = arith.constant 0 : i32
    %23 = arith.cmpi eq, %arg1, %c0_i32_18 : i32
    %24 = arith.extui %23 : i1 to i32
    %c0_i32_19 = arith.constant 0 : i32
    %25 = arith.cmpi ne, %24, %c0_i32_19 : i32
    scf.if %25 {
      %c0_20 = arith.constant 0 : index
      %c0_21 = arith.constant 0 : index
      %26 = vector.load %arg6[%c0_20, %c0_21] : memref<8x1xf32, #tpu.memory_space<vmem>>, vector<8x1xf32>
      %c0_22 = arith.constant 0 : index
      %c0_23 = arith.constant 0 : index
      %27 = vector.load %arg7[%c0_22, %c0_23] : memref<8x1xf32, #tpu.memory_space<vmem>>, vector<8x1xf32>
      %28 = arith.mulf %26, %27 : vector<8x1xf32>
      %cst_24 = arith.constant 1.000000e-16 : f32
      %29 = vector.broadcast %cst_24 : f32 to vector<8x1xf32>
      %30 = arith.maximumf %28, %29 : vector<8x1xf32>
      %31 = math.rsqrt %30 : vector<8x1xf32>
      %c0_25 = arith.constant 0 : index
      %c0_26 = arith.constant 0 : index
      %32 = vector.load %arg5[%c0_25, %c0_26] : memref<8x1xf32, #tpu.memory_space<vmem>>, vector<8x1xf32>
      %33 = arith.mulf %32, %31 : vector<8x1xf32>
      %c0_27 = arith.constant 0 : index
      %c0_28 = arith.constant 0 : index
      %34 = vector.load %arg4[%c0_27, %c0_28] : memref<8x1xf32, #tpu.memory_space<vmem>>, vector<8x1xf32>
      tpu.vector_store %arg4[%c0_27, %c0_28], %33 {strides = array<i32>} : memref<8x1xf32, #tpu.memory_space<vmem>>, vector<8x1xf32>,
    } else {
    }
    return
  }
  func.func @transform_0(%arg0: i32, %arg1: i32) -> (i32, i32) {
    %c0_i32 = arith.constant 0 : i32
    return %arg0, %arg1 : i32, i32
  }
  func.func @transform_1(%arg0: i32, %arg1: i32) -> (i32, i32) {
    %c0_i32 = arith.constant 0 : i32
    return %arg0, %arg1 : i32, i32
  }
  func.func @transform_2(%arg0: i32, %arg1: i32) -> (i32, i32) {
    %c0_i32 = arith.constant 0 : i32
    %c0_i32_0 = arith.constant 0 : i32
    return %arg0, %c0_i32 : i32, i32
  }
}

</mosaic_0001>

<llo_original>
// kernel: cosine_similarity_loss.1
$region0: #{cosine_similarity_loss.1}
  #allocation0 [shape = 'u32[]', space=smem, size = 0x4, offset = 0x4, fixed_abs, tag = 'smem constant byte address 0x4 - core index']
  #allocation1 [shape = 'u32[144,128]{1,0:T(1,128)}', space=vmem, size = 0x12000, scoped, tag = 'internal scratch']
  #allocation2 [shape = 'f32[8,1]{1,0:T(8,128)}', space=vmem, size = 0x1000, scoped, tag = 'scratch operand']
  #allocation3 [shape = 'f32[8,1]{1,0:T(8,128)}', space=vmem, size = 0x1000, scoped, tag = 'scratch operand']
  #allocation4 [shape = 'f32[8,1]{1,0:T(8,128)}', space=vmem, size = 0x1000, scoped, tag = 'scratch operand']
  %s0 = inlined_call_operand.hbm [shape: f32[8,128], index: 0, kind: input, shape index: {}]
  %s1 = inlined_call_operand.hbm [shape: f32[8,128], index: 1, kind: input, shape index: {}]
  %s2 = inlined_call_operand.vmem [shape: f32[8,1], index: 2, kind: output, shape index: {}]
  %s3 = sld [smem:[#allocation0]]
  $region34: #{cosine_similarity_loss.1} parent=0
    _
  %s5 = ssub.s32 1, %s3
  %s6 = scalar_select 0, %s5, %s3
  $region1: #{cosine_similarity_loss.1} parent=0
    #allocation5 [shape = 'u8[4096]{0}', space=vmem, size = 0x1000, scoped, tag = 'input window, operand 0, single buffered']
    #allocation6 [shape = 's32[1]{0}', space=sflag, size = 0x4, scoped, tag = 'scoped memory for cosine_similarity_loss.1']
    #allocation7 [shape = 'u8[4096]{0}', space=vmem, size = 0x1000, scoped, tag = 'input window, operand 1, single buffered']
    #allocation8 [shape = 's32[1]{0}', space=sflag, size = 0x4, scoped, tag = 'scoped memory for cosine_similarity_loss.1']
    %7 = vsyncpa [#allocation6], 0
    %8 = vsyncpa [#allocation8], 0
    // Predicated region
    $region2: #{cosine_similarity_loss.1} parent=1 // pred_check
      _
    $region3: #{cosine_similarity_loss.1} parent=1 // pred_check_branch
      %10 = sbr.rel (0) target = $region5
    $region4: #{cosine_similarity_loss.1} parent=1 // pred_region
      %s12 = ssub.s32 128, 128
      %13 = vsyncadd [#allocation6], %s12
      %s15 = sshll.u32 [#allocation5], 4
      %s16 = int_to_ptr.vmem [resolvable:$true] %s15
      %18 = dma.hbm_to_vmem [thread:$0]  %s0, 128, %s16, [#allocation6]
    $region5: #{cosine_similarity_loss.1} parent=1 // pred_fallthru
      _
    // Predicated region
    $region6: #{cosine_similarity_loss.1} parent=1 // pred_check
      _
    $region7: #{cosine_similarity_loss.1} parent=1 // pred_check_branch
      %20 = sbr.rel (0) target = $region9
    $region8: #{cosine_similarity_loss.1} parent=1 // pred_region
      %s22 = ssub.s32 128, 128
      %23 = vsyncadd [#allocation8], %s22
      %s25 = sshll.u32 [#allocation7], 4
      %s26 = int_to_ptr.vmem [resolvable:$true] %s25
      %28 = dma.hbm_to_vmem [thread:$0]  %s1, 128, %s26, [#allocation8]
    $region9: #{cosine_similarity_loss.1} parent=1 // pred_fallthru
      _
    // Predicated region
    $region10: #{cosine_similarity_loss.1} parent=1 // pred_check
      _
    $region11: #{cosine_similarity_loss.1} parent=1 // pred_check_branch
      %30 = sbr.rel (0) target = $region13
    $region12: #{cosine_similarity_loss.1} parent=1 // pred_region
      %31 = dma.done [#allocation6], 128
    $region13: #{cosine_similarity_loss.1} parent=1 // pred_fallthru
      _
    // Predicated region
    $region14: #{cosine_similarity_loss.1} parent=1 // pred_check
      _
    $region15: #{cosine_similarity_loss.1} parent=1 // pred_check_branch
      %33 = sbr.rel (0) target = $region17
    $region16: #{cosine_similarity_loss.1} parent=1 // pred_region
      %34 = dma.done [#allocation8], 128
    $region17: #{cosine_similarity_loss.1} parent=1 // pred_fallthru
      _
    %p35 = scmp.eq.s32.totalorder 0, 0
    // Predicated region
    $region18: #{cosine_similarity_loss.1} parent=1 // pred_check
      %p36 = pneg %p35
    $region19: #{cosine_similarity_loss.1} parent=1 // pred_check_branch
      %38 = sbr.rel (%p36) target = $region21
    $region20: #{cosine_similarity_loss.1} parent=1 // pred_region
      %vm39 = vcmask 7168
      %40 = vst.msk [vmem:[#allocation2] sm:$0xff] %vm39, 0.0
      %41 = vst.msk [vmem:[#allocation3] sm:$0xff] %vm39, 0.0
      %42 = vst.msk [vmem:[#allocation4] sm:$0xff] %vm39, 0.0
    $region21: #{cosine_similarity_loss.1} parent=1 // pred_fallthru
      _
    %v43 = vld [vmem:[#allocation5] sm:$0xff]
    %v44 = vld [vmem:[#allocation7] sm:$0xff]
    %v45 = vld [vmem:[#allocation2] sm:$0xff]
    %v46 = vmul.f32 %v43, %v44
    %47 = vadd.xlane.f32.xlu0 %v46
    %v48 = vpop.xlane.xlu0 %47
    %v49 = vadd.f32 %v45, %v48
    %vm50 = vcmask 7168
    %51 = vst.msk [vmem:[#allocation2] sm:$0xff] %vm50, %v49
    %v52 = vld [vmem:[#allocation3] sm:$0xff]
    %v53 = vmul.f32 %v43, %v43
    %54 = vadd.xlane.f32.xlu0 %v53
    %v55 = vpop.xlane.xlu0 %54
    %v56 = vadd.f32 %v52, %v55
    %57 = vst.msk [vmem:[#allocation3] sm:$0xff] %vm50, %v56
    %v58 = vld [vmem:[#allocation4] sm:$0xff]
    %v59 = vmul.f32 %v44, %v44
    %60 = vadd.xlane.f32.xlu0 %v59
    %v61 = vpop.xlane.xlu0 %60
    %v62 = vadd.f32 %v58, %v61
    %63 = vst.msk [vmem:[#allocation4] sm:$0xff] %vm50, %v62
    // Predicated region
    $region22: #{cosine_similarity_loss.1} parent=1 // pred_check
      %p64 = pneg %p35
    $region23: #{cosine_similarity_loss.1} parent=1 // pred_check_branch
      %66 = sbr.rel (%p64) target = $region25
    $region24: #{cosine_similarity_loss.1} parent=1 // pred_region
      %v67 = vld [vmem:[#allocation3] sm:$0xff]
      %v68 = vld [vmem:[#allocation4] sm:$0xff]
      %v69 = vmul.f32 %v67, %v68
      %v70 = vmax.f32 %v69, 1e-16
      %v71 = vrsqrt.pop %v70
      %v72 = vld [vmem:[#allocation2] sm:$0xff]
      %v73 = vmul.f32 %v72, %v71
      %74 = vst.msk [vmem:[%s2] sm:$0xff] %vm50, %v73
    $region25: #{cosine_similarity_loss.1} parent=1 // pred_fallthru
      _
    // Predicated region
    $region26: #{cosine_similarity_loss.1} parent=1 // pred_check
      _
    $region27: #{cosine_similarity_loss.1} parent=1 // pred_check_branch
      %76 = sbr.rel (0) target = $region29
    $region28: #{cosine_similarity_loss.1} parent=1 // pred_region
      _
    $region29: #{cosine_similarity_loss.1} parent=1 // pred_fallthru
      _
    // Predicated region
    $region30: #{cosine_similarity_loss.1} parent=1 // pred_check
      _
    $region31: #{cosine_similarity_loss.1} parent=1 // pred_check_branch
      %78 = sbr.rel (0) target = $region33
    $region32: #{cosine_similarity_loss.1} parent=1 // pred_region
      _
    $region33: #{cosine_similarity_loss.1} parent=1 // pred_fallthru
      _
    %79 = vsyncpa [#allocation6], 1
    %80 = vsyncpa [#allocation8], 1

</llo_original>
